<compile_context>
chip_gen: v6e
topology: v6e:2x2x1
jax: 0.10.0
libtpu: 0.0.40
codegen_flags: <defaults>
</compile_context>

<pallas_src>
import jax
import jax.numpy as jnp
from jax.experimental import pallas as pl
from jax.experimental.pallas import tpu as pltpu


def apply_style_kernel(scale1_ref, shift_ref, x_ref, o_ref):
    # scale1_ref / shift_ref: (TBC, 1) f32 ; x_ref / o_ref: (TBC, THW)
    x = x_ref[...].astype(jnp.float32)
    o_ref[...] = (x * scale1_ref[...] + shift_ref[...]).astype(o_ref.dtype)


def _chip_defaults():
    """(target_block_bytes, vmem_limit_bytes) per TPU generation."""
    try:
        kind = jax.devices()[0].device_kind.lower()
    except Exception:  # pragma: no cover - e.g. CPU interpret mode
        kind = ""
    if "v7" in kind:                       # 64 MiB VMEM, ~3.2 TB/s per TC
        return 6 * 1024 * 1024, 48 * 1024 * 1024
    if "v6" in kind:                       # 128 MiB VMEM, ~1.4 TB/s
        return 6 * 1024 * 1024, 64 * 1024 * 1024
    # v5e / unknown: 2 MiB blocks are already <7% step-overhead at 0.8 TB/s.
    return 2 * 1024 * 1024, 32 * 1024 * 1024


def _select_blocks(BC, HW, itemsize, target_bytes):
    """Pick (TBC, THW, n_bc, n_hw) for a (BC, HW) elementwise pass."""
    total_bytes = BC * HW * itemsize

    # Keep >=4 pipelined grid steps for anything over ~1 MiB so compute and
    # output writeback hide under the input DMA and both v7x TCs stream.
    if total_bytes > (1 << 20):
        target_bytes = max(min(target_bytes, total_bytes // 4), 256 * 1024)

    # Lane floor: each DMA row >= 512 B (128 lanes f32, 256 bf16, 512 int8).
    lane_floor = ((max(512 // itemsize, 128) + 127) // 128) * 128

    # Sublane block over the flattened batch*channel axis.
    TBC = BC if BC <= 8 else 8
    row_bytes = HW * itemsize

    if HW <= lane_floor or row_bytes * TBC <= target_bytes:
        # Whole spatial rows per block (full-extent lane dim is exempt from
        # the 128-multiple rule); stack rows in multiples of 8 up to target.
        THW = HW
        if BC > 8:
            rows = max(8, min(BC, target_bytes // max(row_bytes, 1)))
            # Cap rows so the lane-padded (TBC, 1) scale/shift tiles stay small.
            TBC = min(1024, max(8, (rows // 8) * 8))
    else:
        # Split the spatial axis into 128-multiple chunks near the target;
        # pl.cdiv + Pallas masking handles the remainder block.
        lanes = (target_bytes // (TBC * itemsize)) // 128 * 128
        THW = max(lane_floor, lanes)
        THW = min(THW, ((HW + 127) // 128) * 128)

    return TBC, THW, pl.cdiv(BC, TBC), pl.cdiv(HW, THW)


def apply_style(x, latent, weight, bias, *, target_block_bytes=None,
                donate_x=False):
    """x: (B, C, H, W), latent: (B, L), weight: (2C, L), bias: (2C,)."""
    B, C, H, W = x.shape
    HW = H * W
    BC = B * C
    itemsize = jnp.dtype(x.dtype).itemsize

    default_target, vmem_limit = _chip_defaults()
    if target_block_bytes is None:
        target_block_bytes = default_target

    # --- style GEMM hoisted to XLA (one small dot); affine params kept in f32.
    style = (latent.astype(jnp.float32) @ weight.astype(jnp.float32).T
             + bias.astype(jnp.float32))                    # (B, 2C)
    scale1 = (style[:, :C] + 1.0).reshape(BC, 1)            # style[:, 0] + 1
    shift = style[:, C:].reshape(BC, 1)                     # style[:, 1]

    # --- lane-dense 2D layout + generation-aware tiling.
    x2 = x.reshape(BC, HW)
    TBC, THW, n_bc, n_hw = _select_blocks(BC, HW, itemsize, target_block_bytes)

    extra = {}
    if donate_x:
        # Halves peak HBM footprint when the caller donates x (no BW change).
        extra["input_output_aliases"] = {2: 0}

    out2 = pl.pallas_call(
        apply_style_kernel,
        out_shape=jax.ShapeDtypeStruct((BC, HW), x.dtype),
        grid=(n_bc, n_hw),
        in_specs=[
            pl.BlockSpec((TBC, 1), lambda i, j: (i, 0)),     # scale + 1
            pl.BlockSpec((TBC, 1), lambda i, j: (i, 0)),     # shift
            pl.BlockSpec((TBC, THW), lambda i, j: (i, j)),   # x chunk
        ],
        out_specs=pl.BlockSpec((TBC, THW), lambda i, j: (i, j)),
        compiler_params=pltpu.CompilerParams(
            dimension_semantics=("parallel", "parallel"),
            vmem_limit_bytes=vmem_limit,
        ),
        **extra,
    )(scale1, shift, x2)

    return out2.reshape(B, C, H, W)


def apply_style_ref(x, latent, weight, bias):
    """Pure-JAX reference matching the PyTorch forward."""
    style = latent @ weight.T + bias                 # (B, 2C)
    B, C = x.shape[0], x.shape[1]
    style = style.reshape(B, 2, C, 1, 1)
    return x * (style[:, 0] + 1.0) + style[:, 1]


def _run_case(key, B, C, H, W, latent_size):
    kx, kl, kw, kb = jax.random.split(key, 4)
    x = jax.random.normal(kx, (B, C, H, W), dtype=jnp.float32)
    latent = jax.random.normal(kl, (B, latent_size), dtype=jnp.float32)
    bound = 1.0 / (latent_size ** 0.5)
    weight = jax.random.uniform(kw, (2 * C, latent_size),
                                minval=-bound, maxval=bound, dtype=jnp.float32)
    bias = jax.random.uniform(kb, (2 * C,),
                              minval=-bound, maxval=bound, dtype=jnp.float32)

    out = jax.block_until_ready(apply_style(x, latent, weight, bias))
    ref = apply_style_ref(x, latent, weight, bias)
    assert out.shape == (B, C, H, W)
    assert jnp.allclose(out, ref, atol=1e-5, rtol=1e-5), "mismatch vs reference"


if __name__ == "__main__":
    key = jax.random.PRNGKey(0)
    k0, k1 = jax.random.split(key)

    # Small shapes consistent with the module (batch=2, channels=4, 16x16).
    _run_case(k0, B=2, C=4, H=16, W=16, latent_size=32)
    # Odd B*C (=15) exercises the cdiv / masked-remainder sublane path.
    _run_case(k1, B=3, C=5, H=16, W=16, latent_size=32)

    print("KERNEL_OK")
</pallas_src>

<mosaic_0001>
module attributes {stable_mosaic.version = 11 : i64} {
  func.func @apply_style_kernel(%arg0: i32, %arg1: i32, %arg2: memref<8x1xf32, #tpu.memory_space<vmem>>, %arg3: memref<8x1xf32, #tpu.memory_space<vmem>>, %arg4: memref<8x256xf32, #tpu.memory_space<vmem>>, %arg5: memref<8x256xf32, #tpu.memory_space<vmem>>) attributes {dimension_semantics = [#tpu.dimension_semantics<parallel>, #tpu.dimension_semantics<parallel>], iteration_bounds = array<i64: 1, 1>, scalar_prefetch = 0 : i64, scratch_operands = 0 : i64, tpu.core_type = #tpu.core_type<tc>, window_params = [{transform_indices = @transform_0, window_bounds = array<i64: 8, 1>}, {transform_indices = @transform_1, window_bounds = array<i64: 8, 1>}, {transform_indices = @transform_2, window_bounds = array<i64: 8, 256>}, {transform_indices = @transform_3, window_bounds = array<i64: 8, 256>}]} {
    %c0 = arith.constant 0 : index
    %c0_0 = arith.constant 0 : index
    %0 = vector.load %arg4[%c0, %c0_0] : memref<8x256xf32, #tpu.memory_space<vmem>>, vector<8x256xf32>
    %c0_1 = arith.constant 0 : index
    %c0_2 = arith.constant 0 : index
    %1 = vector.load %arg2[%c0_1, %c0_2] : memref<8x1xf32, #tpu.memory_space<vmem>>, vector<8x1xf32>
    %2 = vector.broadcast %1 : vector<8x1xf32> to vector<8x256xf32>
    %3 = arith.mulf %0, %2 : vector<8x256xf32>
    %c0_3 = arith.constant 0 : index
    %c0_4 = arith.constant 0 : index
    %4 = vector.load %arg3[%c0_3, %c0_4] : memref<8x1xf32, #tpu.memory_space<vmem>>, vector<8x1xf32>
    %5 = vector.broadcast %4 : vector<8x1xf32> to vector<8x256xf32>
    %6 = arith.addf %3, %5 : vector<8x256xf32>
    %c0_5 = arith.constant 0 : index
    %c0_6 = arith.constant 0 : index
    %7 = vector.load %arg5[%c0_5, %c0_6] : memref<8x256xf32, #tpu.memory_space<vmem>>, vector<8x256xf32>
    tpu.vector_store %arg5[%c0_5, %c0_6], %6 {strides = array<i32>} : memref<8x256xf32, #tpu.memory_space<vmem>>, vector<8x256xf32>,
    return
  }
  func.func @transform_0(%arg0: i32, %arg1: i32) -> (i32, i32) {
    %c0_i32 = arith.constant 0 : i32
    %c0_i32_0 = arith.constant 0 : i32
    return %arg0, %c0_i32 : i32, i32
  }
  func.func @transform_1(%arg0: i32, %arg1: i32) -> (i32, i32) {
    %c0_i32 = arith.constant 0 : i32
    %c0_i32_0 = arith.constant 0 : i32
    return %arg0, %c0_i32 : i32, i32
  }
  func.func @transform_2(%arg0: i32, %arg1: i32) -> (i32, i32) {
    %c0_i32 = arith.constant 0 : i32
    return %arg0, %arg1 : i32, i32
  }
  func.func @transform_3(%arg0: i32, %arg1: i32) -> (i32, i32) {
    %c0_i32 = arith.constant 0 : i32
    return %arg0, %arg1 : i32, i32
  }
}

</mosaic_0001>

<llo_original>
// kernel: tpu_custom_call.1
$region0: #{tpu_custom_call.1}
  #allocation0 [shape = 'u32[]', space=smem, size = 0x4, offset = 0x4, fixed_abs, tag = 'smem constant byte address 0x4 - core index']
  #allocation1 [shape = 'u32[144,128]{1,0:T(1,128)}', space=vmem, size = 0x12000, scoped, tag = 'internal scratch']
  %s0 = inlined_call_operand.vmem [shape: f32[8,1], index: 0, kind: input, shape index: {}]
  %s1 = inlined_call_operand.vmem [shape: f32[8,1], index: 1, kind: input, shape index: {}]
  %s2 = inlined_call_operand.vmem [shape: f32[8,256], index: 2, kind: input, shape index: {}]
  %s3 = inlined_call_operand.hbm [shape: f32[8,256], index: 3, kind: output, shape index: {}]
  %s4 = sld [smem:[#allocation0]]
  $region22: #{tpu_custom_call.1} parent=0
    _
  %s6 = ssub.s32 1, %s4
  %s7 = scalar_select 0, %s6, %s4
  $region1: #{tpu_custom_call.1} parent=0
    #allocation2 [shape = 'u8[8192]{0}', space=vmem, size = 0x2000, scoped, tag = 'output window, operand 0, single buffered']
    #allocation3 [shape = 's32[1]{0}', space=sflag, size = 0x4, scoped, tag = 'scoped memory for tpu_custom_call.1']
    %8 = vsyncpa [#allocation3], 0
    // Predicated region
    $region2: #{tpu_custom_call.1} parent=1 // pred_check
      _
    $region3: #{tpu_custom_call.1} parent=1 // pred_check_branch
      %10 = sbr.rel (0) target = $region5
    $region4: #{tpu_custom_call.1} parent=1 // pred_region
      _
    $region5: #{tpu_custom_call.1} parent=1 // pred_fallthru
      _
    // Predicated region
    $region6: #{tpu_custom_call.1} parent=1 // pred_check
      _
    $region7: #{tpu_custom_call.1} parent=1 // pred_check_branch
      %12 = sbr.rel (0) target = $region9
    $region8: #{tpu_custom_call.1} parent=1 // pred_region
      _
    $region9: #{tpu_custom_call.1} parent=1 // pred_fallthru
      _
    // Predicated region
    $region10: #{tpu_custom_call.1} parent=1 // pred_check
      _
    $region11: #{tpu_custom_call.1} parent=1 // pred_check_branch
      %14 = sbr.rel (0) target = $region13
    $region12: #{tpu_custom_call.1} parent=1 // pred_region
      _
    $region13: #{tpu_custom_call.1} parent=1 // pred_fallthru
      _
    %v15 = vld [vmem:[%s2] sm:$0xff]
    %v16 = vld [vmem:[%s2 + $0x8] sm:$0xff]
    %v17 = vld [vmem:[%s0] sm:$0xff]
    %19 = vset.pattern.permute.xlu0 0
    %20 = vperm.xlu0 %19, %v17
    %v21 = vpop.permute.xlu0 %20
    %v23 = vmul.f32 %v15, %v21
    %v24 = vmul.f32 %v16, %v21
    %v25 = vld [vmem:[%s1] sm:$0xff]
    %27 = vset.pattern.permute.xlu0 0
    %28 = vperm.xlu0 %27, %v25
    %v29 = vpop.permute.xlu0 %28
    %v31 = vadd.f32 %v23, %v29
    %v32 = vadd.f32 %v24, %v29
    %33 = vst [vmem:[#allocation2] sm:$0xff] %v31
    %34 = vst [vmem:[#allocation2 + $0x8] sm:$0xff] %v32
    // Predicated region
    $region14: #{tpu_custom_call.1} parent=1 // pred_check
      _
    $region15: #{tpu_custom_call.1} parent=1 // pred_check_branch
      %36 = sbr.rel (0) target = $region17
    $region16: #{tpu_custom_call.1} parent=1 // pred_region
      %s38 = ssub.s32 256, 256
      %39 = vsyncadd [#allocation3], %s38
      %s41 = sshll.u32 [#allocation2], 4
      %s42 = int_to_ptr.vmem [resolvable:$true] %s41
      %44 = dma.vmem_to_hbm [thread:$0]  %s42, 256, %s3, [#allocation3]
    $region17: #{tpu_custom_call.1} parent=1 // pred_fallthru
      _
    // Predicated region
    $region18: #{tpu_custom_call.1} parent=1 // pred_check
      _
    $region19: #{tpu_custom_call.1} parent=1 // pred_check_branch
      %46 = sbr.rel (0) target = $region21
    $region20: #{tpu_custom_call.1} parent=1 // pred_region
      %47 = dma.done [#allocation3], 256
    $region21: #{tpu_custom_call.1} parent=1 // pred_fallthru
      _
    %48 = vsyncpa [#allocation3], 1

</llo_original>
